<compile_context>
chip_gen: v7x
topology: tpu7x:2x2x1
jax: 0.10.0
libtpu: 0.0.40
codegen_flags: <defaults>
</compile_context>

<pallas_src>
import functools

import jax
import jax.numpy as jnp
from jax.experimental import pallas as pl
from jax.experimental.pallas import tpu as pltpu


def _round_up(x, m):
    return (x + m - 1) // m * m


def _vmem_capacity_bytes():
    """Query physical VMEM; fall back to the smallest (v7x) figure."""
    try:
        return int(pltpu.get_tpu_info().vmem_capacity_bytes)
    except Exception:
        return 64 << 20


def qnet_kernel(x_ref, w_ref, b_ref, cd_ref, out_ref, *, matmul_dtype, exp_dtype):
    """Fused HL-Gauss Q head for one batch tile.

    x_ref:   (TB, D)    f32 activations (cast to matmul_dtype in-kernel)
    w_ref:   (D, NBp)   matmul-dtype weights (resident, single-buffered)
    b_ref:   (1, NBp)   f32 bias (padded bins hold -1e9 so exp -> 0)
    cd_ref:  (NBp, 2)   f32 [centers | ones] reduction matrix (resident)
    out_ref: (1, TB)    f32 lane-dense q values for this tile
    """
    x = x_ref[...]
    if x.dtype != jnp.dtype(matmul_dtype):
        x = x.astype(matmul_dtype)            # in-kernel pack; no extra HBM pass
    logits = jnp.dot(x, w_ref[...],
                     preferred_element_type=jnp.float32) + b_ref[...]
    # Numerically-stable softmax expectation.  Row-max stays on the XLU; the
    # two lane-reductions (sum e*c, sum e) become one small MXU matmul.
    m = jnp.max(logits, axis=-1, keepdims=True)
    d = logits - m
    if jnp.dtype(exp_dtype) != jnp.dtype(jnp.float32):
        d = d.astype(exp_dtype)               # optional bf16 EUP path (v6e/v7x)
    e = jnp.exp(d).astype(cd_ref.dtype)       # (TB, NBp)
    nd = jnp.dot(e, cd_ref[...], preferred_element_type=jnp.float32)  # (TB, 2)
    num = nd[:, 0:1]                          # (TB, 1)
    den = nd[:, 1:2]                          # (TB, 1)
    q = num * pl.reciprocal(den, approx=True)  # EUP reciprocal
    out_ref[...] = jnp.transpose(q).astype(out_ref.dtype)   # (1, TB) lane-dense


def _choose_tile_b(B, D, nbp, big_vmem):
    """Pick the batch tile.

    Small B -> one full-batch tile.  Large B -> VMEM-budgeted multiple of 128;
    on 128 MiB parts (v5e/v6e) use a large budget/ceiling, on small-VMEM parts
    (v7x) stay conservative AND force >= 2 grid steps so both TensorCores get
    work from the "parallel" batch axis.
    """
    if B <= 128:
        return _round_up(max(B, 8), 8)
    budget = (56 << 20) if big_vmem else (24 << 20)
    ceiling = 2048 if big_vmem else 1024
    # Per-row working set: double-buffered f32 x + bf16 x copy + f32 logits/e + out.
    per_row = 2 * D * 4 + D * 2 + 2 * nbp * 4 + 8
    cap = max(128, min(ceiling, (budget // per_row) // 128 * 128))
    if not big_vmem:
        # v7x has 2 TCs/chip: guarantee at least 2 grid steps.
        cap = min(cap, _round_up(pl.cdiv(B, 2), 128))
    return max(128, min(cap, _round_up(B, 128)))


def qnet_forward(x, w, b, centers, *, tile_b=None,
                 matmul_dtype=jnp.bfloat16, exp_dtype=jnp.float32):
    B, D = x.shape
    num_bins = w.shape[1]
    nbp = _round_up(num_bins, 128)            # lane-dense bin count

    vmem_capacity = _vmem_capacity_bytes()
    big_vmem = vmem_capacity >= (96 << 20)    # v5e/v6e (128 MiB) vs v7x (64 MiB)

    if tile_b is None:
        tile_b = _choose_tile_b(B, D, nbp, big_vmem)
    B_pad = _round_up(B, tile_b)
    num_tiles = B_pad // tile_b

    # x is streamed in its original dtype (f32); the bf16 cast is in-kernel.
    xin = x
    if B_pad != B:
        # Guarded pad pass (only when B % tile_b != 0).  Padded rows produce
        # finite garbage q (zero logits -> uniform softmax) that is sliced off.
        xin = jnp.pad(xin, ((0, B_pad - B), (0, 0)))

    # Parameters are prepared host-side once (they are small / reusable).
    wq = w.astype(matmul_dtype)
    bq = b.astype(jnp.float32).reshape(1, num_bins)
    cq = centers.astype(jnp.float32).reshape(num_bins)
    ones = jnp.ones((num_bins,), jnp.float32)
    if nbp != num_bins:
        pad = nbp - num_bins
        wq = jnp.pad(wq, ((0, 0), (0, pad)))                          # zero logits
        bq = jnp.pad(bq, ((0, 0), (0, pad)), constant_values=-1e9)    # exp -> 0
        cq = jnp.pad(cq, ((0, pad),))
        ones = jnp.pad(ones, ((0, pad),))
    cd = jnp.stack([cq, ones], axis=1)        # (nbp, 2): [centers | ones]

    in_itemsize = jnp.dtype(matmul_dtype).itemsize
    est = (2 * tile_b * D * 4                 # double-buffered f32 x tiles
           + tile_b * D * in_itemsize         # in-kernel packed copy of x
           + D * nbp * in_itemsize            # single-buffered resident W
           + nbp * 4 * 3                      # bias + CD
           + 2 * tile_b * nbp * 4             # logits + e working set (f32)
           + 4 * tile_b * 4)                  # nd + double-buffered out slab
    cap_limit = (100 << 20) if big_vmem else (48 << 20)
    vmem_limit = int(min(max(2 * est, 32 << 20), cap_limit))

    kernel = functools.partial(qnet_kernel,
                               matmul_dtype=matmul_dtype,
                               exp_dtype=exp_dtype)

    out_row = pl.pallas_call(
        kernel,
        out_shape=jax.ShapeDtypeStruct((1, B_pad), jnp.float32),
        grid_spec=pl.GridSpec(
            grid=(num_tiles,),
            in_specs=[
                # x tile: streamed, default double-buffered.
                # TODO(synk): per v5e review, bump to pl.Buffered(3) if a
                # profile on v5e shows exposed DMA for large-D inputs.
                pl.BlockSpec((tile_b, D), lambda i: (i, 0)),
                # Resident operands: constant index_map -> single-buffered.
                pl.BlockSpec((D, nbp), lambda i: (0, 0),
                             pipeline_mode=pl.Buffered(1)),
                pl.BlockSpec((1, nbp), lambda i: (0, 0),
                             pipeline_mode=pl.Buffered(1)),
                pl.BlockSpec((nbp, 2), lambda i: (0, 0),
                             pipeline_mode=pl.Buffered(1)),
            ],
            out_specs=pl.BlockSpec((1, tile_b), lambda i: (0, i)),
        ),
        compiler_params=pltpu.CompilerParams(
            dimension_semantics=("parallel",),
            vmem_limit_bytes=vmem_limit),
    )(xin, wq, bq, cd)

    # Free layout plumbing back to the (B, 1) column the module returns.
    return out_row[0, :B].reshape(B, 1)


def make_centers(min_value, max_value, num_bins):
    support = jnp.linspace(min_value, max_value, num_bins + 1, dtype=jnp.float32)
    return (support[:-1] + support[1:]) / 2.0


if __name__ == "__main__":
    key = jax.random.PRNGKey(0)
    MIN_V, MAX_V = -10.0, 10.0

    def run_case(B, D, num_bins, tile_b=None):
        kx, kw, kb = jax.random.split(
            jax.random.fold_in(key, B * 1000 + num_bins), 3)
        x = jax.random.normal(kx, (B, D), dtype=jnp.float32)
        w = jax.random.normal(kw, (D, num_bins), dtype=jnp.float32) * 0.05
        b = jax.random.normal(kb, (1, num_bins), dtype=jnp.float32) * 0.01
        centers = make_centers(MIN_V, MAX_V, num_bins)

        out = jax.block_until_ready(
            qnet_forward(x, w, b, centers, tile_b=tile_b))
        assert out.shape == (B, 1) and out.shape[1] == 1

        # Pure-JAX reference (same bf16 matmul precision; exact softmax/divide).
        logits = jnp.dot(x.astype(jnp.bfloat16), w.astype(jnp.bfloat16),
                         preferred_element_type=jnp.float32) + b
        probs = jax.nn.softmax(logits, axis=1)
        ref = jnp.sum(probs * centers.reshape(1, num_bins), axis=-1)[:, None]
        err = float(jnp.max(jnp.abs(out - ref)))
        assert jnp.allclose(out, ref, atol=2e-2, rtol=2e-2), err

    # Small case: single full-batch tile; num_bins=101 exercises the bin pad.
    run_case(B=8, D=32, num_bins=101)
    # Multi-step grid with padded batch (exercises lane-dense blocked output).
    run_case(B=260, D=64, num_bins=128, tile_b=128)
    # Auto tile selection for B > 128 (>= 2 steps on small-VMEM / v7x parts).
    run_case(B=256, D=64, num_bins=128)

    print("KERNEL_OK")
</pallas_src>

<mosaic_0001>
module attributes {stable_mosaic.version = 11 : i64} {
  func.func @qnet_kernel(%arg0: i32, %arg1: memref<8x32xf32, #tpu.memory_space<vmem>>, %arg2: memref<32x128xbf16, #tpu.memory_space<vmem>>, %arg3: memref<1x128xf32, #tpu.memory_space<vmem>>, %arg4: memref<128x2xf32, #tpu.memory_space<vmem>>, %arg5: memref<1x8xf32, #tpu.memory_space<vmem>>) attributes {dimension_semantics = [#tpu.dimension_semantics<parallel>], iteration_bounds = array<i64: 1>, scalar_prefetch = 0 : i64, scratch_operands = 0 : i64, tpu.core_type = #tpu.core_type<tc>, window_params = [{transform_indices = @transform_0, window_bounds = array<i64: 8, 32>}, {pipeline_mode = #tpu.pipeline_mode<synchronous>, transform_indices = @transform_1, window_bounds = array<i64: 32, 128>}, {pipeline_mode = #tpu.pipeline_mode<synchronous>, transform_indices = @transform_2, window_bounds = array<i64: 1, 128>}, {pipeline_mode = #tpu.pipeline_mode<synchronous>, transform_indices = @transform_3, window_bounds = array<i64: 128, 2>}, {transform_indices = @transform_4, window_bounds = array<i64: 1, 8>}]} {
    %c0 = arith.constant 0 : index
    %c0_0 = arith.constant 0 : index
    %0 = vector.load %arg1[%c0, %c0_0] : memref<8x32xf32, #tpu.memory_space<vmem>>, vector<8x32xf32>
    %1 = arith.truncf %0 : vector<8x32xf32> to vector<8x32xbf16>
    %c0_1 = arith.constant 0 : index
    %c0_2 = arith.constant 0 : index
    %2 = vector.load %arg2[%c0_1, %c0_2] : memref<32x128xbf16, #tpu.memory_space<vmem>>, vector<32x128xbf16>
    %cst = arith.constant dense<0.000000e+00> : vector<8x128xf32>
    %3 = tpu.matmul %1, %2, %cst {dimension_numbers = #tpu.dot_dimension_numbers<[1], [0], [0], [1], [0, 0, 1, 1], [], []>} : vector<8x32xbf16>, vector<32x128xbf16>, vector<8x128xf32> -> vector<8x128xf32>
    %c0_3 = arith.constant 0 : index
    %c0_4 = arith.constant 0 : index
    %4 = vector.load %arg3[%c0_3, %c0_4] : memref<1x128xf32, #tpu.memory_space<vmem>>, vector<1x128xf32>
    %5 = vector.broadcast %4 : vector<1x128xf32> to vector<8x128xf32>
    %6 = arith.addf %3, %5 : vector<8x128xf32>
    %cst_5 = arith.constant dense<0xFF800000> : vector<8xf32>
    %7 = vector.multi_reduction <maximumf>, %6, %cst_5 [1] : vector<8x128xf32> to vector<8xf32>
    %8 = vector.shape_cast %7 : vector<8xf32> to vector<8x1xf32>
    %9 = vector.broadcast %8 : vector<8x1xf32> to vector<8x128xf32>
    %10 = arith.subf %6, %9 : vector<8x128xf32>
    %11 = math.exp %10 : vector<8x128xf32>
    %c0_6 = arith.constant 0 : index
    %c0_7 = arith.constant 0 : index
    %12 = vector.load %arg4[%c0_6, %c0_7] : memref<128x2xf32, #tpu.memory_space<vmem>>, vector<128x2xf32>
    %cst_8 = arith.constant dense<0.000000e+00> : vector<8x2xf32>
    %13 = tpu.matmul %11, %12, %cst_8 {dimension_numbers = #tpu.dot_dimension_numbers<[1], [0], [0], [1], [0, 0, 1, 1], [], []>} : vector<8x128xf32>, vector<128x2xf32>, vector<8x2xf32> -> vector<8x2xf32>
    %14 = vector.extract_strided_slice %13 {offsets = [0, 0], sizes = [8, 1], strides = [1, 1]} : vector<8x2xf32> to vector<8x1xf32>
    %15 = vector.extract_strided_slice %13 {offsets = [0, 1], sizes = [8, 1], strides = [1, 1]} : vector<8x2xf32> to vector<8x1xf32>
    %16 = tpu.reciprocal %15 {approx = true} : vector<8x1xf32> -> vector<8x1xf32>
    %17 = arith.mulf %14, %16 : vector<8x1xf32>
    %18 = tpu.transpose %17, [1, 0] : vector<8x1xf32> -> vector<1x8xf32>
    %c0_9 = arith.constant 0 : index
    %c0_10 = arith.constant 0 : index
    %19 = vector.load %arg5[%c0_9, %c0_10] : memref<1x8xf32, #tpu.memory_space<vmem>>, vector<1x8xf32>
    tpu.vector_store %arg5[%c0_9, %c0_10], %18 {strides = array<i32>} : memref<1x8xf32, #tpu.memory_space<vmem>>, vector<1x8xf32>,
    return
  }
  func.func @transform_0(%arg0: i32) -> (i32, i32) {
    %c0_i32 = arith.constant 0 : i32
    %c0_i32_0 = arith.constant 0 : i32
    return %arg0, %c0_i32 : i32, i32
  }
  func.func @transform_1(%arg0: i32) -> (i32, i32) {
    %c0_i32 = arith.constant 0 : i32
    %c0_i32_0 = arith.constant 0 : i32
    %c0_i32_1 = arith.constant 0 : i32
    return %c0_i32, %c0_i32_0 : i32, i32
  }
  func.func @transform_2(%arg0: i32) -> (i32, i32) {
    %c0_i32 = arith.constant 0 : i32
    %c0_i32_0 = arith.constant 0 : i32
    %c0_i32_1 = arith.constant 0 : i32
    return %c0_i32, %c0_i32_0 : i32, i32
  }
  func.func @transform_3(%arg0: i32) -> (i32, i32) {
    %c0_i32 = arith.constant 0 : i32
    %c0_i32_0 = arith.constant 0 : i32
    %c0_i32_1 = arith.constant 0 : i32
    return %c0_i32, %c0_i32_0 : i32, i32
  }
  func.func @transform_4(%arg0: i32) -> (i32, i32) {
    %c0_i32 = arith.constant 0 : i32
    %c0_i32_0 = arith.constant 0 : i32
    return %c0_i32, %arg0 : i32, i32
  }
}

</mosaic_0001>

<llo_original>
// kernel: tpu_custom_call.1
$region0: #{tpu_custom_call.1}
  #allocation0 [shape = 'u32[]', space=smem, size = 0x4, offset = 0x4, fixed_abs, tag = 'smem constant byte address 0x4 - core index']
  #allocation1 [shape = 'u32[144,128]{1,0:T(1,128)}', space=vmem, size = 0x12000, scoped, tag = 'internal scratch']
  %s0 = inlined_call_operand.vmem [shape: f32[8,32], index: 0, kind: input, shape index: {}]
  %s1 = inlined_call_operand.vmem [shape: bf16[32,128], index: 1, kind: input, shape index: {}]
  %s2 = inlined_call_operand.vmem [shape: f32[1,128], index: 2, kind: input, shape index: {}]
  %s3 = inlined_call_operand.vmem [shape: f32[128,2], index: 3, kind: input, shape index: {}]
  %s4 = inlined_call_operand.hbm [shape: f32[1,8], index: 4, kind: output, shape index: {}]
  %s5 = sld [smem:[#allocation0]]
  $region26: #{tpu_custom_call.1} parent=0
    _
  %s7 = ssub.s32 1, %s5
  %s8 = scalar_select 0, %s7, %s5
  $region1: #{tpu_custom_call.1} parent=0
    #allocation2 [shape = 'u8[512]{0}', space=vmem, size = 0x400, scoped, tag = 'output window, operand 0, single buffered']
    #allocation3 [shape = 's32[1]{0}', space=sflag, size = 0x4, scoped, tag = 'scoped memory for tpu_custom_call.1']
    %9 = vsyncpa [#allocation3], 0
    // Predicated region
    $region2: #{tpu_custom_call.1} parent=1 // pred_check
      _
    $region3: #{tpu_custom_call.1} parent=1 // pred_check_branch
      %11 = sbr.rel (0) target = $region5
    $region4: #{tpu_custom_call.1} parent=1 // pred_region
      _
    $region5: #{tpu_custom_call.1} parent=1 // pred_fallthru
      _
    // Predicated region
    $region6: #{tpu_custom_call.1} parent=1 // pred_check
      _
    $region7: #{tpu_custom_call.1} parent=1 // pred_check_branch
      %13 = sbr.rel (0) target = $region9
    $region8: #{tpu_custom_call.1} parent=1 // pred_region
      _
    $region9: #{tpu_custom_call.1} parent=1 // pred_fallthru
      _
    // Predicated region
    $region10: #{tpu_custom_call.1} parent=1 // pred_check
      _
    $region11: #{tpu_custom_call.1} parent=1 // pred_check_branch
      %15 = sbr.rel (0) target = $region13
    $region12: #{tpu_custom_call.1} parent=1 // pred_region
      _
    $region13: #{tpu_custom_call.1} parent=1 // pred_fallthru
      _
    // Predicated region
    $region14: #{tpu_custom_call.1} parent=1 // pred_check
      _
    $region15: #{tpu_custom_call.1} parent=1 // pred_check_branch
      %17 = sbr.rel (0) target = $region17
    $region16: #{tpu_custom_call.1} parent=1 // pred_region
      _
    $region17: #{tpu_custom_call.1} parent=1 // pred_fallthru
      _
    %v19 = vld [vmem:[%s0] sm:$0xff]
    %v20 = vpack.c.bf16 %v19, %v19
    %v21 = vld [vmem:[%s1] sm:$0xf]
    %v22 = vld [vmem:[%s1 + $0x4] sm:$0xf]
    %v23 = vld [vmem:[%s1 + $0x8] sm:$0xf]
    %v24 = vld [vmem:[%s1 + $0xc] sm:$0xf]
    %v25 = vld [vmem:[%s2] sm:$0x1]
    %v27 = vlaneseq
    %v28 = vshrl.u32 %v27, 7
    %v29 = vsub.s32 0, %v28
    %v30 = vrot.slane %v25, %v29
    %v36 = vunpack.c.l.b16 %v21
    %v37 = vunpack.c.l.b16 %v22
    %v38 = vunpack.c.l.b16 %v23
    %v39 = vunpack.c.l.b16 %v24
    %v40 = vpack.c.b16 %v37, %v36
    %v41 = vpack.c.b16 %v39, %v38
    %vm44 = vcmask 261120
    %v46 = vsel %vm44, %v20, 0
    %48 = vmatprep.subr.bf16.mxu0 0
    %49 = vmatpush1.bf16.msra.mxu0 %v40
    %50 = vmatprep.subr.bf16.mxu0 0
    %51 = vmatpush1.bf16.msra.mxu0 %v41
    %52 = vmatprep.subr.bf16.mxu0 0
    %53 = vmatpush1.bf16.msra.mxu0 0
    %54 = vmatprep.subr.bf16.mxu0 0
    %55 = vmatpush1.bf16.msra.mxu0 0
    %56 = vmatprep.subr.bf16.mxu0 0
    %57 = vmatpush1.bf16.msra.mxu0 0
    %58 = vmatprep.subr.bf16.mxu0 0
    %59 = vmatpush1.bf16.msra.mxu0 0
    %60 = vmatprep.subr.bf16.mxu0 0
    %61 = vmatpush1.bf16.msra.mxu0 0
    %62 = vmatprep.subr.bf16.mxu0 0
    %63 = vmatpush1.bf16.msra.mxu0 0
    %64 = vmatprep.subr.bf16.mxu0 0
    %65 = vmatpush1.bf16.msra.mxu0 0
    %66 = vmatprep.subr.bf16.mxu0 0
    %67 = vmatpush1.bf16.msra.mxu0 0
    %68 = vmatprep.subr.bf16.mxu0 0
    %69 = vmatpush1.bf16.msra.mxu0 0
    %70 = vmatprep.subr.bf16.mxu0 0
    %71 = vmatpush1.bf16.msra.mxu0 0
    %72 = vmatprep.subr.bf16.mxu0 0
    %73 = vmatpush1.bf16.msra.mxu0 0
    %74 = vmatprep.subr.bf16.mxu0 0
    %75 = vmatpush1.bf16.msra.mxu0 0
    %76 = vmatprep.subr.bf16.mxu0 0
    %77 = vmatpush1.bf16.msra.mxu0 0
    %78 = vmatprep.subr.bf16.mxu0 0
    %79 = vmatpush1.bf16.msra.mxu0 0
    %80 = vmatprep.mubr.bf16.mxu0 0
    %81 = vmatmul.mubr.bf16.gmra.mrb[0].mxu0 %v46
    %v82 = vpop.f32.mrb[0].mxu0
    %v83 = vadd.f32 %v30, %v82
    %v84 = vpop.f32.mrb[0].mxu0
    %v85 = vpop.f32.mrb[0].mxu0
    %v86 = vpop.f32.mrb[0].mxu0
    %87 = vdwg.mxu0
    %88 = vmax.xlane.f32.xlu0 %v83
    %v89 = vpop.xlane.xlu0 %88
    %v90 = vsub.f32 %v83, %v89
    %v91 = vmul.f32 %v90, 1.442695
    %v92 = vpow.pop %v91
    %v93 = vld [vmem:[%s3] sm:$0xff]
    %v94 = vld [vmem:[%s3 + $0x8] sm:$0xff]
    %v95 = vld [vmem:[%s3 + $0x10] sm:$0xff]
    %v96 = vld [vmem:[%s3 + $0x18] sm:$0xff]
    %v97 = vld [vmem:[%s3 + $0x20] sm:$0xff]
    %v98 = vld [vmem:[%s3 + $0x28] sm:$0xff]
    %v99 = vld [vmem:[%s3 + $0x30] sm:$0xff]
    %v100 = vld [vmem:[%s3 + $0x38] sm:$0xff]
    %v101 = vld [vmem:[%s3 + $0x40] sm:$0xff]
    %v102 = vld [vmem:[%s3 + $0x48] sm:$0xff]
    %v103 = vld [vmem:[%s3 + $0x50] sm:$0xff]
    %v104 = vld [vmem:[%s3 + $0x58] sm:$0xff]
    %v105 = vld [vmem:[%s3 + $0x60] sm:$0xff]
    %v106 = vld [vmem:[%s3 + $0x68] sm:$0xff]
    %v107 = vld [vmem:[%s3 + $0x70] sm:$0xff]
    %v108 = vld [vmem:[%s3 + $0x78] sm:$0xff]
    %109 = vmatprep.subr.mxu0 0.0
    %110 = vmatpush1.msra.mxu0 %v93
    %111 = vmatprep.subr.mxu0 0.0
    %112 = vmatpush1.msra.mxu0 %v94
    %113 = vmatprep.subr.mxu0 0.0
    %114 = vmatpush1.msra.mxu0 %v95
    %115 = vmatprep.subr.mxu0 0.0
    %116 = vmatpush1.msra.mxu0 %v96
    %117 = vmatprep.subr.mxu0 0.0
    %118 = vmatpush1.msra.mxu0 %v97
    %119 = vmatprep.subr.mxu0 0.0
    %120 = vmatpush1.msra.mxu0 %v98
    %121 = vmatprep.subr.mxu0 0.0
    %122 = vmatpush1.msra.mxu0 %v99
    %123 = vmatprep.subr.mxu0 0.0
    %124 = vmatpush1.msra.mxu0 %v100
    %125 = vmatprep.subr.mxu0 0.0
    %126 = vmatpush1.msra.mxu0 %v101
    %127 = vmatprep.subr.mxu0 0.0
    %128 = vmatpush1.msra.mxu0 %v102
    %129 = vmatprep.subr.mxu0 0.0
    %130 = vmatpush1.msra.mxu0 %v103
    %131 = vmatprep.subr.mxu0 0.0
    %132 = vmatpush1.msra.mxu0 %v104
    %133 = vmatprep.subr.mxu0 0.0
    %134 = vmatpush1.msra.mxu0 %v105
    %135 = vmatprep.subr.mxu0 0.0
    %136 = vmatpush1.msra.mxu0 %v106
    %137 = vmatprep.subr.mxu0 0.0
    %138 = vmatpush1.msra.mxu0 %v107
    %139 = vmatprep.subr.mxu0 0.0
    %140 = vmatpush1.msra.mxu0 %v108
    %141 = vmatprep.subr.mxu0 0.0
    %142 = vmatpush1.msra.mxu0 0.0
    %143 = vmatprep.subr.mxu0 0.0
    %144 = vmatpush1.msra.mxu0 0.0
    %145 = vmatprep.subr.mxu0 0.0
    %146 = vmatpush1.msra.mxu0 0.0
    %147 = vmatprep.subr.mxu0 0.0
    %148 = vmatpush1.msra.mxu0 0.0
    %149 = vmatprep.subr.mxu0 0.0
    %150 = vmatpush1.msra.mxu0 0.0
    %151 = vmatprep.subr.mxu0 0.0
    %152 = vmatpush1.msra.mxu0 0.0
    %153 = vmatprep.subr.mxu0 0.0
    %154 = vmatpush1.msra.mxu0 0.0
    %155 = vmatprep.subr.mxu0 0.0
    %156 = vmatpush1.msra.mxu0 0.0
    %157 = vmatprep.subr.mxu0 0.0
    %158 = vmatpush1.msra.mxu0 0.0
    %159 = vmatprep.subr.mxu0 0.0
    %160 = vmatpush1.msra.mxu0 0.0
    %161 = vmatprep.subr.mxu0 0.0
    %162 = vmatpush1.msra.mxu0 0.0
    %163 = vmatprep.subr.mxu0 0.0
    %164 = vmatpush1.msra.mxu0 0.0
    %165 = vmatprep.subr.mxu0 0.0
    %166 = vmatpush1.msra.mxu0 0.0
    %167 = vmatprep.subr.mxu0 0.0
    %168 = vmatpush1.msra.mxu0 0.0
    %169 = vmatprep.subr.mxu0 0.0
    %170 = vmatpush1.msra.mxu0 0.0
    %171 = vmatprep.subr.mxu0 0.0
    %172 = vmatpush1.msra.mxu0 0.0
    %173 = vmatprep.mubr.f32.mxu0 0.0
    %174 = vmatmul.mubr.f32.gmra.mrb[0].mxu0 %v92
    %v175 = vpop.f32.mrb[0].mxu0
    %v176 = vadd.f32 0.0, %v175
    %v177 = vpop.f32.mrb[0].mxu0
    %178 = vdwg.mxu0
    %v179 = vrcp.pop %v176
    %181 = vrot.lane.b32.xlu0 %v179, 127
    %v182 = vpop.permute.xlu0 %181
    %v184 = vmul.f32 %v176, %v182
    %185 = vxpose.xlu0.b32.start [1/16] %v184, 128
    %186 = vxpose.xlu0.b32.cont [2/16] 0.0, 128
    %187 = vxpose.xlu0.b32.cont [3/16] 0.0, 128
    %188 = vxpose.xlu0.b32.cont [4/16] 0.0, 128
    %189 = vxpose.xlu0.b32.cont [5/16] 0.0, 128
    %190 = vxpose.xlu0.b32.cont [6/16] 0.0, 128
    %191 = vxpose.xlu0.b32.cont [7/16] 0.0, 128
    %192 = vxpose.xlu0.b32.cont [8/16] 0.0, 128
    %193 = vxpose.xlu0.b32.cont [9/16] 0.0, 128
    %194 = vxpose.xlu0.b32.cont [10/16] 0.0, 128
    %195 = vxpose.xlu0.b32.cont [11/16] 0.0, 128
    %196 = vxpose.xlu0.b32.cont [12/16] 0.0, 128
    %197 = vxpose.xlu0.b32.cont [13/16] 0.0, 128
    %198 = vxpose.xlu0.b32.cont [14/16] 0.0, 128
    %199 = vxpose.xlu0.b32.cont [15/16] 0.0, 128
    %200 = vxpose.xlu0.b32.end [16/16] 0.0, 128
    %v201 = vpop.trf.xlu0
    %v202 = vpop.trf.xlu0
    %v203 = vpop.trf.xlu0
    %v204 = vpop.trf.xlu0
    %v205 = vpop.trf.xlu0
    %v206 = vpop.trf.xlu0
    %v207 = vpop.trf.xlu0
    %v208 = vpop.trf.xlu0
    %v209 = vpop.trf.xlu0
    %v210 = vpop.trf.xlu0
    %v211 = vpop.trf.xlu0
    %v212 = vpop.trf.xlu0
    %v213 = vpop.trf.xlu0
    %v214 = vpop.trf.xlu0
    %v215 = vpop.trf.xlu0
    %v216 = vpop.trf.xlu0
    %vm217 = vcmask 57344
    %218 = vst.msk [vmem:[#allocation2] sm:$0x1] %vm217, %v201
    // Predicated region
    $region18: #{tpu_custom_call.1} parent=1 // pred_check
      _
    $region19: #{tpu_custom_call.1} parent=1 // pred_check_branch
      %220 = sbr.rel (0) target = $region21
    $region20: #{tpu_custom_call.1} parent=1 // pred_region
      %s222 = ssub.s32 16, 16
      %223 = vsyncadd [#allocation3], %s222
      %s225 = sshll.u32 [#allocation2], 4
      %s226 = int_to_ptr.vmem [resolvable:$true] %s225
      %228 = dma.vmem_to_hbm [thread:$0]  %s226, 16, %s4, [#allocation3]
    $region21: #{tpu_custom_call.1} parent=1 // pred_fallthru
      _
    // Predicated region
    $region22: #{tpu_custom_call.1} parent=1 // pred_check
      _
    $region23: #{tpu_custom_call.1} parent=1 // pred_check_branch
      %230 = sbr.rel (0) target = $region25
    $region24: #{tpu_custom_call.1} parent=1 // pred_region
      %231 = dma.done [#allocation3], 16
    $region25: #{tpu_custom_call.1} parent=1 // pred_fallthru
      _
    %232 = vsyncpa [#allocation3], 1

</llo_original>
